<compile_context>
chip_gen: v5e
topology: v5e:2x2
jax: 0.10.0
libtpu: 0.0.40
codegen_flags: <defaults>
</compile_context>

<pallas_src>
import jax
import jax.numpy as jnp
from jax.experimental import pallas as pl
from jax.experimental.pallas import tpu as pltpu


def _round_up(x, m):
    return ((x + m - 1) // m) * m


# ---------------------------------------------------------------------------
# Kernel body: three matmuls with bf16 MXU operands, f32 accumulate/epilogue
# (v5e has no bf16 VPU, so bias-add / ReLU stay f32), bf16 lane-dense store.
# ---------------------------------------------------------------------------
def mlp_kernel(x_ref, w1_ref, b1_ref, w2_ref, b2_ref, w3_ref, b3_ref, o_ref):
    # Layer 1: Linear + ReLU.  x is already bf16 (cast once outside the call).
    h1 = jnp.dot(x_ref[...], w1_ref[...], preferred_element_type=jnp.float32)
    h1 = jnp.maximum(h1 + b1_ref[...], 0.0)
    # Layer 2: Linear + ReLU.
    h2 = jnp.dot(h1.astype(jnp.bfloat16), w2_ref[...],
                 preferred_element_type=jnp.float32)
    h2 = jnp.maximum(h2 + b2_ref[...], 0.0)
    # Classifier: Linear.  Output columns are zero-padded to a multiple of 128
    # so this store is an unmasked, lane-dense vst.
    out = jnp.dot(h2.astype(jnp.bfloat16), w3_ref[...],
                  preferred_element_type=jnp.float32)
    o_ref[...] = (out + b3_ref[...]).astype(o_ref.dtype)


# ---------------------------------------------------------------------------
# One-time probe: does this JAX build accept pipeline_mode=pl.Buffered(1)?
# Isolated so failures here never mask lowering errors of the real kernel.
# ---------------------------------------------------------------------------
_BUFFERED1_SUPPORTED = None


def _buffered1_supported():
    global _BUFFERED1_SUPPORTED
    if _BUFFERED1_SUPPORTED is not None:
        return _BUFFERED1_SUPPORTED
    try:
        def _probe_kernel(a_ref, o_ref):
            o_ref[...] = a_ref[...]

        probe = pl.pallas_call(
            _probe_kernel,
            out_shape=jax.ShapeDtypeStruct((8, 128), jnp.float32),
            grid_spec=pltpu.PrefetchScalarGridSpec(
                num_scalar_prefetch=0,
                grid=(1,),
                in_specs=[pl.BlockSpec((8, 128), lambda i: (0, 0),
                                       pipeline_mode=pl.Buffered(1))],
                out_specs=pl.BlockSpec((8, 128), lambda i: (0, 0)),
            ),
        )
        jax.jit(probe).lower(
            jax.ShapeDtypeStruct((8, 128), jnp.float32)).compile()
        _BUFFERED1_SUPPORTED = True
    except Exception:  # isolated probe only; real kernel has no blanket except
        _BUFFERED1_SUPPORTED = False
    return _BUFFERED1_SUPPORTED


# ---------------------------------------------------------------------------
# VMEM model + generation-aware block picker.
# ---------------------------------------------------------------------------
def _vmem_capacity_bytes():
    try:
        cap = int(pltpu.get_tpu_info().vmem_capacity_bytes)
        if cap > 0:
            return cap
    except Exception:
        pass
    return 64 * 1024 * 1024  # conservative default (v7x per-TensorCore)


def _vmem_bytes(block_batch, input_dim, h1p, h2p, out_pad,
                *, weight_bufs=1, x_bufs=2):
    """Resident-VMEM estimate for one grid step."""
    w = (input_dim * h1p + h1p * h2p + h2p * out_pad) * 2 * weight_bufs  # bf16
    b = (h1p + h2p + out_pad) * 4 * weight_bufs                          # f32
    x = x_bufs * block_batch * input_dim * 2                             # bf16
    o = 2 * block_batch * out_pad * 2                                    # bf16
    act = block_batch * (h1p + h2p) * 4                                  # f32
    return w + b + x + o + act


def _pick_block_batch(B, input_dim, h1p, h2p, out_pad,
                      *, weight_bufs, x_bufs, target=1024):
    """Multiple-of-8 batch tile that fits ~70% of this chip's VMEM.  Large
    tiles amortize the ~0.35us/step overhead (measured 29/63/85/86% of HBM
    roofline at 128/256/512/1024 rows); grid >= 2 is forced for B >= 16 so the
    'parallel' grid axis can shard across v7x's two TensorCores."""
    budget = int(0.70 * _vmem_capacity_bytes())
    bb = min(target, _round_up(max(B, 8), 8))
    if B >= 16:
        bb = min(bb, _round_up(pl.cdiv(B, 2), 8))
    bb = max(8, _round_up(bb, 8))
    while bb > 8 and _vmem_bytes(bb, input_dim, h1p, h2p, out_pad,
                                 weight_bufs=weight_bufs,
                                 x_bufs=x_bufs) > budget:
        bb -= 8
    return max(bb, 8)


# ---------------------------------------------------------------------------
# One-time parameter preparation (do this at init, NOT per forward call).
# ---------------------------------------------------------------------------
def prepare_mlp_params(w1, b1, w2, b2, w3, b3):
    """Weights are expected pre-transposed as (in_features, out_features).
    Returns bf16 weights / f32 biases with hidden and output dims zero-padded
    to multiples of 128 (full-lane MXU passes, lane-dense stores).  Padding is
    numerically exact (zero weights/biases, ReLU(0)=0) and sliced off by the
    wrapper."""
    input_dim, h1 = w1.shape
    h2 = w2.shape[1]
    output_dim = w3.shape[1]
    h1p, h2p, outp = (_round_up(d, 128) for d in (h1, h2, output_dim))

    def pad2(a, rows, cols, dtype):
        buf = jnp.zeros((rows, cols), dtype)
        return buf.at[:a.shape[0], :a.shape[1]].set(a.astype(dtype))

    # TODO(synk): on v7x, fp8 weight storage (scales folded into the bias)
    # would halve resident weight VMEM; not portable to v5e/v6e so kept bf16.
    w1b = pad2(w1, input_dim, h1p, jnp.bfloat16)
    w2b = pad2(w2, h1p, h2p, jnp.bfloat16)
    w3b = pad2(w3, h2p, outp, jnp.bfloat16)
    b1f = pad2(jnp.reshape(b1, (1, -1)), 1, h1p, jnp.float32)
    b2f = pad2(jnp.reshape(b2, (1, -1)), 1, h2p, jnp.float32)
    b3f = pad2(jnp.reshape(b3, (1, -1)), 1, outp, jnp.float32)
    return (w1b, b1f, w2b, b2f, w3b, b3f, output_dim)


# ---------------------------------------------------------------------------
# Forward pass.
# ---------------------------------------------------------------------------
def mlp_forward(x, params, *, block_batch=None, x_buffers=2):
    """Fused MLP forward.  x: (B, input_dim), ideally already bf16 (cast once
    upstream); returns (B, output_dim) bf16 logits."""
    w1b, b1f, w2b, b2f, w3b, b3f, output_dim = params
    B, input_dim = x.shape
    assert w1b.shape[0] == input_dim, (w1b.shape, input_dim)
    h1p, h2p, out_pad = w1b.shape[1], w2b.shape[1], w3b.shape[1]

    x = x.astype(jnp.bfloat16)  # no-op when the caller already streams bf16

    weight_bufs = 1 if _buffered1_supported() else 2
    if block_batch is None:
        block_batch = _pick_block_batch(B, input_dim, h1p, h2p, out_pad,
                                        weight_bufs=weight_bufs,
                                        x_bufs=x_buffers)
    block_batch = max(8, _round_up(block_batch, 8))

    # Pad the batch up to a multiple of the tile instead of falling back to a
    # single giant tile (keeps pipelining + the VMEM budget + grid sharding).
    padded_B = _round_up(B, block_batch)
    if padded_B != B:
        x = jnp.pad(x, ((0, padded_B - B), (0, 0)))
    grid = (padded_B // block_batch,)

    flops = 2 * padded_B * (input_dim * h1p + h1p * h2p + h2p * out_pad)
    bytes_accessed = (
        padded_B * input_dim * 2                                # x (bf16)
        + (w1b.size + w2b.size + w3b.size) * 2                  # weights (bf16)
        + (b1f.size + b2f.size + b3f.size) * 4                  # biases (f32)
        + padded_B * out_pad * 2)                               # out (bf16)

    est = _vmem_bytes(block_batch, input_dim, h1p, h2p, out_pad,
                      weight_bufs=weight_bufs, x_bufs=x_buffers)
    cap = _vmem_capacity_bytes()
    vmem_limit = int(min(max(2 * est, 32 * 1024 * 1024), int(0.85 * cap)))

    def const_spec(shape):
        # Constant-index weight/bias blocks: never re-fetched across steps;
        # request a single resident buffer when the build supports it.
        if weight_bufs == 1:
            return pl.BlockSpec(shape, lambda i: (0, 0),
                                pipeline_mode=pl.Buffered(1))
        return pl.BlockSpec(shape, lambda i: (0, 0))

    if x_buffers == 2 or weight_bufs != 1:
        # Default double-buffered x stream (sweep x_buffers=3 if per-step DMA
        # is still exposed for very small hidden dims).
        x_spec = pl.BlockSpec((block_batch, input_dim), lambda i: (i, 0))
    else:
        x_spec = pl.BlockSpec((block_batch, input_dim), lambda i: (i, 0),
                              pipeline_mode=pl.Buffered(x_buffers))

    out_padded = pl.pallas_call(
        mlp_kernel,
        out_shape=jax.ShapeDtypeStruct((padded_B, out_pad), jnp.bfloat16),
        grid_spec=pltpu.PrefetchScalarGridSpec(
            num_scalar_prefetch=0,
            grid=grid,
            in_specs=[
                x_spec,
                const_spec((input_dim, h1p)),
                const_spec((1, h1p)),
                const_spec((h1p, h2p)),
                const_spec((1, h2p)),
                const_spec((h2p, out_pad)),
                const_spec((1, out_pad)),
            ],
            out_specs=pl.BlockSpec((block_batch, out_pad), lambda i: (i, 0)),
        ),
        compiler_params=pltpu.CompilerParams(
            dimension_semantics=("parallel",),
            vmem_limit_bytes=vmem_limit,
        ),
        cost_estimate=pl.CostEstimate(
            flops=flops, transcendentals=0, bytes_accessed=bytes_accessed),
    )(x, w1b, b1f, w2b, b2f, w3b, b3f)

    # Slice batch/lane padding back off outside the kernel.
    return out_padded[:B, :output_dim]


def mlp_classifier(x, w1, b1, w2, b2, w3, b3, **kwargs):
    """Convenience wrapper.  In production call prepare_mlp_params() once and
    reuse the prepared params across forward calls."""
    return mlp_forward(x, prepare_mlp_params(w1, b1, w2, b2, w3, b3), **kwargs)


def init_linear(key, in_dim, out_dim, dtype=jnp.float32):
    """Deterministic init mimicking nn.Linear's uniform(-1/sqrt(in), 1/sqrt(in)).
    Weight returned pre-transposed as (in_dim, out_dim), bias as (out_dim,)."""
    kw, kb = jax.random.split(key)
    bound = 1.0 / jnp.sqrt(jnp.asarray(in_dim, dtype))
    w = jax.random.uniform(kw, (in_dim, out_dim), dtype, minval=-bound, maxval=bound)
    b = jax.random.uniform(kb, (out_dim,), dtype, minval=-bound, maxval=bound)
    return w, b


if __name__ == "__main__":
    # Small shapes consistent with MLPClassifier(input_dim, h1, h2, out).
    batch = 16
    input_dim = 32
    hidden_dim1 = 64
    hidden_dim2 = 32
    output_dim = 16

    key = jax.random.PRNGKey(0)
    kx, k1, k2, k3 = jax.random.split(key, 4)

    x = jax.random.normal(kx, (batch, input_dim), jnp.float32)
    w1, b1 = init_linear(k1, input_dim, hidden_dim1)
    w2, b2 = init_linear(k2, hidden_dim1, hidden_dim2)
    w3, b3 = init_linear(k3, hidden_dim2, output_dim)

    # One-time prep: pre-transposed bf16 weights, zero-padded to 128 lanes.
    params = prepare_mlp_params(w1, b1, w2, b2, w3, b3)
    # Cast the activation stream to bf16 once upstream of the forward calls.
    x_bf16 = x.astype(jnp.bfloat16)

    # Warm the one-time pipeline_mode probe outside of any jit trace.
    _buffered1_supported()

    # block_batch=8 -> grid=(2,): exercises the pipelined / two-TensorCore path
    # even at this toy batch size.
    fwd = jax.jit(lambda xb: mlp_forward(xb, params, block_batch=8))
    out = jax.block_until_ready(fwd(x_bf16))
    assert out.shape == (batch, output_dim)
    assert out.dtype == jnp.bfloat16

    # Auto block picker + non-divisible batch (padded/sliced) path.
    out2 = jax.block_until_ready(mlp_forward(x_bf16[:10], params))
    assert out2.shape == (10, output_dim)

    # Reference 1: identical precision recipe (bf16 operands, f32 accumulate).
    w1r, w2r, w3r = (w.astype(jnp.bfloat16) for w in (w1, w2, w3))
    h1r = jnp.maximum(jnp.dot(x_bf16, w1r,
                              preferred_element_type=jnp.float32) + b1, 0.0)
    h2r = jnp.maximum(jnp.dot(h1r.astype(jnp.bfloat16), w2r,
                              preferred_element_type=jnp.float32) + b2, 0.0)
    ref_bf16 = jnp.dot(h2r.astype(jnp.bfloat16), w3r,
                       preferred_element_type=jnp.float32) + b3
    assert jnp.allclose(out.astype(jnp.float32), ref_bf16,
                        atol=3e-2, rtol=3e-2), "mismatch vs bf16 ref"
    assert jnp.allclose(out2.astype(jnp.float32), ref_bf16[:10],
                        atol=3e-2, rtol=3e-2), "mismatch vs bf16 ref (padded B)"

    # Reference 2: full-f32 PyTorch-equivalent forward (loose sanity check;
    # the kernel streams bf16 activations / weights with f32 accumulation).
    h1f = jnp.maximum(x @ w1 + b1, 0.0)
    h2f = jnp.maximum(h1f @ w2 + b2, 0.0)
    ref_f32 = h2f @ w3 + b3
    assert jnp.allclose(out.astype(jnp.float32), ref_f32,
                        atol=1e-1, rtol=1e-1), "mismatch vs f32 ref"

    print("KERNEL_OK")
</pallas_src>

<mosaic_0001>
module attributes {stable_mosaic.version = 11 : i64} {
  func.func @mlp_kernel(%arg0: i32, %arg1: memref<8x32xbf16, #tpu.memory_space<vmem>>, %arg2: memref<32x128xbf16, #tpu.memory_space<vmem>>, %arg3: memref<1x128xf32, #tpu.memory_space<vmem>>, %arg4: memref<128x128xbf16, #tpu.memory_space<vmem>>, %arg5: memref<1x128xf32, #tpu.memory_space<vmem>>, %arg6: memref<128x128xbf16, #tpu.memory_space<vmem>>, %arg7: memref<1x128xf32, #tpu.memory_space<vmem>>, %arg8: memref<8x128xbf16, #tpu.memory_space<vmem>>) attributes {dimension_semantics = [#tpu.dimension_semantics<parallel>], iteration_bounds = array<i64: 2>, scalar_prefetch = 0 : i64, scratch_operands = 0 : i64, tpu.core_type = #tpu.core_type<tc>, window_params = [{transform_indices = @transform_0, window_bounds = array<i64: 8, 32>}, {pipeline_mode = #tpu.pipeline_mode<synchronous>, transform_indices = @transform_1, window_bounds = array<i64: 32, 128>}, {pipeline_mode = #tpu.pipeline_mode<synchronous>, transform_indices = @transform_2, window_bounds = array<i64: 1, 128>}, {pipeline_mode = #tpu.pipeline_mode<synchronous>, transform_indices = @transform_3, window_bounds = array<i64: 128, 128>}, {pipeline_mode = #tpu.pipeline_mode<synchronous>, transform_indices = @transform_4, window_bounds = array<i64: 1, 128>}, {pipeline_mode = #tpu.pipeline_mode<synchronous>, transform_indices = @transform_5, window_bounds = array<i64: 128, 128>}, {pipeline_mode = #tpu.pipeline_mode<synchronous>, transform_indices = @transform_6, window_bounds = array<i64: 1, 128>}, {transform_indices = @transform_7, window_bounds = array<i64: 8, 128>}]} {
    %c0 = arith.constant 0 : index
    %c0_0 = arith.constant 0 : index
    %0 = vector.load %arg1[%c0, %c0_0] : memref<8x32xbf16, #tpu.memory_space<vmem>>, vector<8x32xbf16>
    %c0_1 = arith.constant 0 : index
    %c0_2 = arith.constant 0 : index
    %1 = vector.load %arg2[%c0_1, %c0_2] : memref<32x128xbf16, #tpu.memory_space<vmem>>, vector<32x128xbf16>
    %cst = arith.constant dense<0.000000e+00> : vector<8x128xf32>
    %2 = tpu.matmul %0, %1, %cst {dimension_numbers = #tpu.dot_dimension_numbers<[1], [0], [0], [1], [0, 0, 1, 1], [], []>} : vector<8x32xbf16>, vector<32x128xbf16>, vector<8x128xf32> -> vector<8x128xf32>
    %c0_3 = arith.constant 0 : index
    %c0_4 = arith.constant 0 : index
    %3 = vector.load %arg3[%c0_3, %c0_4] : memref<1x128xf32, #tpu.memory_space<vmem>>, vector<1x128xf32>
    %4 = vector.broadcast %3 : vector<1x128xf32> to vector<8x128xf32>
    %5 = arith.addf %2, %4 : vector<8x128xf32>
    %cst_5 = arith.constant 0.000000e+00 : f32
    %6 = vector.broadcast %cst_5 : f32 to vector<8x128xf32>
    %7 = arith.maximumf %5, %6 : vector<8x128xf32>
    %8 = arith.truncf %7 : vector<8x128xf32> to vector<8x128xbf16>
    %c0_6 = arith.constant 0 : index
    %c0_7 = arith.constant 0 : index
    %9 = vector.load %arg4[%c0_6, %c0_7] : memref<128x128xbf16, #tpu.memory_space<vmem>>, vector<128x128xbf16>
    %cst_8 = arith.constant dense<0.000000e+00> : vector<8x128xf32>
    %10 = tpu.matmul %8, %9, %cst_8 {dimension_numbers = #tpu.dot_dimension_numbers<[1], [0], [0], [1], [0, 0, 1, 1], [], []>} : vector<8x128xbf16>, vector<128x128xbf16>, vector<8x128xf32> -> vector<8x128xf32>
    %c0_9 = arith.constant 0 : index
    %c0_10 = arith.constant 0 : index
    %11 = vector.load %arg5[%c0_9, %c0_10] : memref<1x128xf32, #tpu.memory_space<vmem>>, vector<1x128xf32>
    %12 = vector.broadcast %11 : vector<1x128xf32> to vector<8x128xf32>
    %13 = arith.addf %10, %12 : vector<8x128xf32>
    %cst_11 = arith.constant 0.000000e+00 : f32
    %14 = vector.broadcast %cst_11 : f32 to vector<8x128xf32>
    %15 = arith.maximumf %13, %14 : vector<8x128xf32>
    %16 = arith.truncf %15 : vector<8x128xf32> to vector<8x128xbf16>
    %c0_12 = arith.constant 0 : index
    %c0_13 = arith.constant 0 : index
    %17 = vector.load %arg6[%c0_12, %c0_13] : memref<128x128xbf16, #tpu.memory_space<vmem>>, vector<128x128xbf16>
    %cst_14 = arith.constant dense<0.000000e+00> : vector<8x128xf32>
    %18 = tpu.matmul %16, %17, %cst_14 {dimension_numbers = #tpu.dot_dimension_numbers<[1], [0], [0], [1], [0, 0, 1, 1], [], []>} : vector<8x128xbf16>, vector<128x128xbf16>, vector<8x128xf32> -> vector<8x128xf32>
    %c0_15 = arith.constant 0 : index
    %c0_16 = arith.constant 0 : index
    %19 = vector.load %arg7[%c0_15, %c0_16] : memref<1x128xf32, #tpu.memory_space<vmem>>, vector<1x128xf32>
    %20 = vector.broadcast %19 : vector<1x128xf32> to vector<8x128xf32>
    %21 = arith.addf %18, %20 : vector<8x128xf32>
    %22 = arith.truncf %21 : vector<8x128xf32> to vector<8x128xbf16>
    %c0_17 = arith.constant 0 : index
    %c0_18 = arith.constant 0 : index
    %23 = vector.load %arg8[%c0_17, %c0_18] : memref<8x128xbf16, #tpu.memory_space<vmem>>, vector<8x128xbf16>
    tpu.vector_store %arg8[%c0_17, %c0_18], %22 {strides = array<i32>} : memref<8x128xbf16, #tpu.memory_space<vmem>>, vector<8x128xbf16>,
    return
  }
  func.func @transform_0(%arg0: i32) -> (i32, i32) {
    %c0_i32 = arith.constant 0 : i32
    %c0_i32_0 = arith.constant 0 : i32
    return %arg0, %c0_i32 : i32, i32
  }
  func.func @transform_1(%arg0: i32) -> (i32, i32) {
    %c0_i32 = arith.constant 0 : i32
    %c0_i32_0 = arith.constant 0 : i32
    %c0_i32_1 = arith.constant 0 : i32
    return %c0_i32, %c0_i32_0 : i32, i32
  }
  func.func @transform_2(%arg0: i32) -> (i32, i32) {
    %c0_i32 = arith.constant 0 : i32
    %c0_i32_0 = arith.constant 0 : i32
    %c0_i32_1 = arith.constant 0 : i32
    return %c0_i32, %c0_i32_0 : i32, i32
  }
  func.func @transform_3(%arg0: i32) -> (i32, i32) {
    %c0_i32 = arith.constant 0 : i32
    %c0_i32_0 = arith.constant 0 : i32
    %c0_i32_1 = arith.constant 0 : i32
    return %c0_i32, %c0_i32_0 : i32, i32
  }
  func.func @transform_4(%arg0: i32) -> (i32, i32) {
    %c0_i32 = arith.constant 0 : i32
    %c0_i32_0 = arith.constant 0 : i32
    %c0_i32_1 = arith.constant 0 : i32
    return %c0_i32, %c0_i32_0 : i32, i32
  }
  func.func @transform_5(%arg0: i32) -> (i32, i32) {
    %c0_i32 = arith.constant 0 : i32
    %c0_i32_0 = arith.constant 0 : i32
    %c0_i32_1 = arith.constant 0 : i32
    return %c0_i32, %c0_i32_0 : i32, i32
  }
  func.func @transform_6(%arg0: i32) -> (i32, i32) {
    %c0_i32 = arith.constant 0 : i32
    %c0_i32_0 = arith.constant 0 : i32
    %c0_i32_1 = arith.constant 0 : i32
    return %c0_i32, %c0_i32_0 : i32, i32
  }
  func.func @transform_7(%arg0: i32) -> (i32, i32) {
    %c0_i32 = arith.constant 0 : i32
    %c0_i32_0 = arith.constant 0 : i32
    return %arg0, %c0_i32 : i32, i32
  }
}

</mosaic_0001>

<llo_original>
// kernel: _lambda_.1
$region0: #{_lambda_.1}
  #allocation0 [shape = 'u32[]', space=smem, size = 0x4, offset = 0x4, fixed_abs, tag = 'smem constant byte address 0x4 - core index']
  #allocation1 [shape = 'u32[72,128]{1,0:T(1,128)}', space=vmem, size = 0x9000, scoped, tag = 'internal scratch']
  %s0 = inlined_call_operand.hbm [shape: bf16[16,32], index: 0, kind: input, shape index: {}]
  %s1 = inlined_call_operand.hbm [shape: bf16[32,128], index: 1, kind: input, shape index: {}]
  %s2 = inlined_call_operand.hbm [shape: f32[1,128], index: 2, kind: input, shape index: {}]
  %s3 = inlined_call_operand.hbm [shape: bf16[128,128], index: 3, kind: input, shape index: {}]
  %s4 = inlined_call_operand.vmem [shape: f32[1,128], index: 4, kind: input, shape index: {}]
  %s5 = inlined_call_operand.hbm [shape: bf16[128,128], index: 5, kind: input, shape index: {}]
  %s6 = inlined_call_operand.vmem [shape: f32[1,128], index: 6, kind: input, shape index: {}]
  %s7 = inlined_call_operand.hbm [shape: bf16[16,128], index: 7, kind: output, shape index: {}]
  %s8 = sld [smem:[#allocation0]]
  $region81: #{_lambda_.1} parent=0
    _
  %s10 = ssub.s32 1, %s8
  %s11 = scalar_select 0, %s10, %s8
  $region1: #{_lambda_.1} parent=0
    #allocation2 [shape = 'u8[4096]{0}', space=vmem, size = 0x1000, scoped, tag = 'input window, operand 0']
    #allocation3 [shape = 's32[2]{0}', space=sflag, size = 0x8, scoped, tag = 'scoped memory for _lambda_.1']
    #allocation4 [shape = 's32[2]{0}', space=sflag, size = 0x8, scoped, tag = 'scoped memory for _lambda_.1']
    #allocation5 [shape = 'u8[8192]{0}', space=vmem, size = 0x2000, scoped, tag = 'input window, operand 1, single buffered']
    #allocation6 [shape = 's32[1]{0}', space=sflag, size = 0x4, scoped, tag = 'scoped memory for _lambda_.1']
    #allocation7 [shape = 'u8[512]{0}', space=vmem, size = 0x400, scoped, tag = 'input window, operand 2, single buffered']
    #allocation8 [shape = 'u8[32768]{0}', space=vmem, size = 0x8000, scoped, tag = 'input window, operand 3, single buffered']
    #allocation9 [shape = 's32[1]{0}', space=sflag, size = 0x4, scoped, tag = 'scoped memory for _lambda_.1']
    #allocation10 [shape = 'u8[32768]{0}', space=vmem, size = 0x8000, scoped, tag = 'input window, operand 5, single buffered']
    #allocation11 [shape = 'u8[4096]{0}', space=vmem, size = 0x1000, scoped, tag = 'output window, operand 0']
    %12 = vsyncpa [#allocation3], 0
    %s13 = scalar_lea.sflag [#allocation3], 1
    %14 = vsyncpa %s13, 0
    %15 = vsyncpa [#allocation6], 0
    %16 = vsyncpa [#allocation9], 0
    %17 = vsyncpa [#allocation4], 0
    %s18 = scalar_lea.sflag [#allocation4], 1
    %19 = vsyncpa %s18, 0
    loop: start=0, step=1, limit=4
    $region2: #{_lambda_.1} parent=1 // loop_pre_header
      _
    $region3: #{_lambda_.1} parent=1 // loop_header
      %s21 = sphi 0, %s25
      %p22 = scmp.ge.s32.totalorder %s21, 4
      %s31 = sphi 0, %s33
      %s34 = sphi 0, %s31
      %s35 = sphi 0, %s34
      %s51 = sphi 0, %s35
      %s55 = sphi 0, %s55
      %s57 = sphi 0, %s55
      %s58 = sphi 0, %s57
      %s72 = sphi 0, %s58
      %s76 = sphi 0, %s76
      %s78 = sphi 0, %s76
      %s79 = sphi 0, %s78
      %s93 = sphi 0, %s79
      %s97 = sphi 0, %s97
      %s99 = sphi 0, %s97
      %s100 = sphi 0, %s99
      %s114 = sphi 0, %s100
      %s118 = sphi 0, %s118
      %s120 = sphi 0, %s118
      %s121 = sphi 0, %s120
      %s135 = sphi 0, %s121
      %s139 = sphi 0, %s139
      %s141 = sphi 0, %s139
      %s142 = sphi 0, %s141
      %s156 = sphi 0, %s142
      %s160 = sphi 0, %s160
      %s162 = sphi 0, %s160
      %s163 = sphi 0, %s162
      %s177 = sphi 0, %s163
      %s183 = sphi 0, %s185
      %s186 = sphi 0, %s183
      %s187 = sphi 0, %s186
      %s203 = sphi 0, %s187
    $region4: #{_lambda_.1} parent=1 // loop_header_branch
      %24 = sbr.rel (%p22) target = $region8
    $region5: #{_lambda_.1} parent=1 // loop_body
      %s26 = ssub.s32 %s21, 1
      %s27 = ssub.s32 %s21, 2
      %s28 = sadd.s32 %s21, 1
      %s29 = ssub.s32 %s21, %s28
      %p30 = scmp.eq.s32.totalorder %s29, 0
      %s32 = sadd.s32 %s31, 1
      %s33 = scalar_select %p30, %s31, %s32
      %p36 = pneg %p30
      %p37 = scmp.eq.s32.totalorder %s21, 1
      %p38 = por %p36, %p37
      %p39 = scmp.ne.s32.totalorder %s31, %s34
      %p40 = scmp.eq.s32.totalorder %s21, 0
      %p41 = por %p39, %p40
      %p42 = scmp.ne.s32.totalorder %s31, %s34
      %p43 = scmp.eq.s32.totalorder %s26, 1
      %p44 = por %p42, %p43
      %p45 = scmp.ne.s32.totalorder %s34, %s35
      %p46 = scmp.eq.s32.totalorder %s26, 0
      %p47 = por %p45, %p46
      %p48 = scmp.ne.s32.totalorder %s34, %s35
      %p49 = scmp.eq.s32.totalorder %s27, 1
      %p50 = por %p48, %p49
      %p52 = scmp.ne.s32.totalorder %s35, %s51
      %p53 = scmp.eq.s32.totalorder %s27, 0
      %p54 = por %p52, %p53
      %s56 = sadd.s32 %s55, 1
      %p59 = scmp.eq.s32.totalorder %s21, 1
      %p60 = scmp.ne.s32.totalorder %s55, %s57
      %p61 = scmp.eq.s32.totalorder %s21, 0
      %p62 = por %p60, %p61
      %p63 = scmp.ne.s32.totalorder %s55, %s57
      %p64 = scmp.eq.s32.totalorder %s26, 1
      %p65 = por %p63, %p64
      %p66 = scmp.ne.s32.totalorder %s57, %s58
      %p67 = scmp.eq.s32.totalorder %s26, 0
      %p68 = por %p66, %p67
      %p69 = scmp.ne.s32.totalorder %s57, %s58
      %p70 = scmp.eq.s32.totalorder %s27, 1
      %p71 = por %p69, %p70
      %p73 = scmp.ne.s32.totalorder %s58, %s72
      %p74 = scmp.eq.s32.totalorder %s27, 0
      %p75 = por %p73, %p74
      %s77 = sadd.s32 %s76, 1
      %p80 = scmp.eq.s32.totalorder %s21, 1
      %p81 = scmp.ne.s32.totalorder %s76, %s78
      %p82 = scmp.eq.s32.totalorder %s21, 0
      %p83 = por %p81, %p82
      %p84 = scmp.ne.s32.totalorder %s76, %s78
      %p85 = scmp.eq.s32.totalorder %s26, 1
      %p86 = por %p84, %p85
      %p87 = scmp.ne.s32.totalorder %s78, %s79
      %p88 = scmp.eq.s32.totalorder %s26, 0
      %p89 = por %p87, %p88
      %p90 = scmp.ne.s32.totalorder %s78, %s79
      %p91 = scmp.eq.s32.totalorder %s27, 1
      %p92 = por %p90, %p91
      %p94 = scmp.ne.s32.totalorder %s79, %s93
      %p95 = scmp.eq.s32.totalorder %s27, 0
      %p96 = por %p94, %p95
      %s98 = sadd.s32 %s97, 1
      %p101 = scmp.eq.s32.totalorder %s21, 1
      %p102 = scmp.ne.s32.totalorder %s97, %s99
      %p103 = scmp.eq.s32.totalorder %s21, 0
      %p104 = por %p102, %p103
      %p105 = scmp.ne.s32.totalorder %s97, %s99
      %p106 = scmp.eq.s32.totalorder %s26, 1
      %p107 = por %p105, %p106
      %p108 = scmp.ne.s32.totalorder %s99, %s100
      %p109 = scmp.eq.s32.totalorder %s26, 0
      %p110 = por %p108, %p109
      %p111 = scmp.ne.s32.totalorder %s99, %s100
      %p112 = scmp.eq.s32.totalorder %s27, 1
      %p113 = por %p111, %p112
      %p115 = scmp.ne.s32.totalorder %s100, %s114
      %p116 = scmp.eq.s32.totalorder %s27, 0
      %p117 = por %p115, %p116
      %s119 = sadd.s32 %s118, 1
      %p122 = scmp.eq.s32.totalorder %s21, 1
      %p123 = scmp.ne.s32.totalorder %s118, %s120
      %p124 = scmp.eq.s32.totalorder %s21, 0
      %p125 = por %p123, %p124
      %p126 = scmp.ne.s32.totalorder %s118, %s120
      %p127 = scmp.eq.s32.totalorder %s26, 1
      %p128 = por %p126, %p127
      %p129 = scmp.ne.s32.totalorder %s120, %s121
      %p130 = scmp.eq.s32.totalorder %s26, 0
      %p131 = por %p129, %p130
      %p132 = scmp.ne.s32.totalorder %s120, %s121
      %p133 = scmp.eq.s32.totalorder %s27, 1
      %p134 = por %p132, %p133
      %p136 = scmp.ne.s32.totalorder %s121, %s135
      %p137 = scmp.eq.s32.totalorder %s27, 0
      %p138 = por %p136, %p137
      %s140 = sadd.s32 %s139, 1
      %p143 = scmp.eq.s32.totalorder %s21, 1
      %p144 = scmp.ne.s32.totalorder %s139, %s141
      %p145 = scmp.eq.s32.totalorder %s21, 0
      %p146 = por %p144, %p145
      %p147 = scmp.ne.s32.totalorder %s139, %s141
      %p148 = scmp.eq.s32.totalorder %s26, 1
      %p149 = por %p147, %p148
      %p150 = scmp.ne.s32.totalorder %s141, %s142
      %p151 = scmp.eq.s32.totalorder %s26, 0
      %p152 = por %p150, %p151
      %p153 = scmp.ne.s32.totalorder %s141, %s142
      %p154 = scmp.eq.s32.totalorder %s27, 1
      %p155 = por %p153, %p154
      %p157 = scmp.ne.s32.totalorder %s142, %s156
      %p158 = scmp.eq.s32.totalorder %s27, 0
      %p159 = por %p157, %p158
      %s161 = sadd.s32 %s160, 1
      %p164 = scmp.eq.s32.totalorder %s21, 1
      %p165 = scmp.ne.s32.totalorder %s160, %s162
      %p166 = scmp.eq.s32.totalorder %s21, 0
      %p167 = por %p165, %p166
      %p168 = scmp.ne.s32.totalorder %s160, %s162
      %p169 = scmp.eq.s32.totalorder %s26, 1
      %p170 = por %p168, %p169
      %p171 = scmp.ne.s32.totalorder %s162, %s163
      %p172 = scmp.eq.s32.totalorder %s26, 0
      %p173 = por %p171, %p172
      %p174 = scmp.ne.s32.totalorder %s162, %s163
      %p175 = scmp.eq.s32.totalorder %s27, 1
      %p176 = por %p174, %p175
      %p178 = scmp.ne.s32.totalorder %s163, %s177
      %p179 = scmp.eq.s32.totalorder %s27, 0
      %p180 = por %p178, %p179
      %s181 = ssub.s32 %s21, %s28
      %p182 = scmp.eq.s32.totalorder %s181, 0
      %s184 = sadd.s32 %s183, 1
      %s185 = scalar_select %p182, %s183, %s184
      %p188 = pneg %p182
      %p189 = scmp.eq.s32.totalorder %s21, 1
      %p190 = por %p188, %p189
      %p191 = scmp.ne.s32.totalorder %s183, %s186
      %p192 = scmp.eq.s32.totalorder %s21, 0
      %p193 = por %p191, %p192
      %p194 = scmp.ne.s32.totalorder %s183, %s186
      %p195 = scmp.eq.s32.totalorder %s26, 1
      %p196 = por %p194, %p195
      %p197 = scmp.ne.s32.totalorder %s186, %s187
      %p198 = scmp.eq.s32.totalorder %s26, 0
      %p199 = por %p197, %p198
      %p200 = scmp.ne.s32.totalorder %s186, %s187
      %p201 = scmp.eq.s32.totalorder %s27, 1
      %p202 = por %p200, %p201
      %p204 = scmp.ne.s32.totalorder %s187, %s203
      %p205 = scmp.eq.s32.totalorder %s27, 0
      %p206 = por %p204, %p205
      %p207 = scmp.le.s32.totalorder 1, %s21
      %p208 = scmp.lt.s32.totalorder %s21, 3
      %p209 = pnand %p207, %p208
      %p210 = pneg %p209
      // Predicated region
      $region9: #{_lambda_.1} parent=5 // pred_check
        _
      $region10: #{_lambda_.1} parent=5 // pred_check_branch
        %212 = sbr.rel (%p209) target = $region12
      $region11: #{_lambda_.1} parent=5 // pred_region
        %s213 = ssub.s32 %s21, 1
        // Predicated region
        $region13: #{_lambda_.1} parent=11 // pred_check
          %p214 = pneg %p68
        $region14: #{_lambda_.1} parent=11 // pred_check_branch
          %216 = sbr.rel (%p214) target = $region16
        $region15: #{_lambda_.1} parent=11 // pred_region
          %218 = vsyncadd [#allocation6], 0
          %s219 = sshll.u32 %s1, 4
          %s220 = int_to_ptr.hbm [resolvable:$true] %s219
          %s221 = sshll.u32 [#allocation5], 4
          %s222 = int_to_ptr.vmem [resolvable:$true] %s221
          %227 = dma.hbm_to_vmem [thread:$0]  %s220, 256, %s222, [#allocation6], 64, 64, 4
        $region16: #{_lambda_.1} parent=11 // pred_fallthru
          _
        // Predicated region
        $region17: #{_lambda_.1} parent=11 // pred_check
          %p228 = pneg %p89
        $region18: #{_lambda_.1} parent=11 // pred_check_branch
          %230 = sbr.rel (%p228) target = $region20
        $region19: #{_lambda_.1} parent=11 // pred_region
          %232 = vsyncadd [#allocation6], 0
          %s234 = sshll.u32 %s2, 4
          %s235 = int_to_ptr.hbm [resolvable:$true] %s234
          %s236 = sshll.u32 [#allocation7], 4
          %s237 = int_to_ptr.vmem [resolvable:$true] %s236
          %239 = dma.hbm_to_vmem [thread:$0]  %s235, 16, %s237, [#allocation6]
        $region20: #{_lambda_.1} parent=11 // pred_fallthru
          _
        // Predicated region
        $region21: #{_lambda_.1} parent=11 // pred_check
          %p240 = pneg %p110
        $region22: #{_lambda_.1} parent=11 // pred_check_branch
          %242 = sbr.rel (%p240) target = $region24
        $region23: #{_lambda_.1} parent=11 // pred_region
          %244 = vsyncadd [#allocation9], 0
          %s245 = sshll.u32 %s3, 4
          %s246 = int_to_ptr.hbm [resolvable:$true] %s245
          %s247 = sshll.u32 [#allocation8], 4
          %s248 = int_to_ptr.vmem [resolvable:$true] %s247
          %253 = dma.hbm_to_vmem [thread:$0]  %s246, 1024, %s248, [#allocation9], 64, 64, 4
        $region24: #{_lambda_.1} parent=11 // pred_fallthru
          _
        // Predicated region
        $region25: #{_lambda_.1} parent=11 // pred_check
          %p254 = pneg %p131
        $region26: #{_lambda_.1} parent=11 // pred_check_branch
          %256 = sbr.rel (%p254) target = $region28
        $region27: #{_lambda_.1} parent=11 // pred_region
          _
        $region28: #{_lambda_.1} parent=11 // pred_fallthru
          _
        // Predicated region
        $region29: #{_lambda_.1} parent=11 // pred_check
          %p257 = pneg %p152
        $region30: #{_lambda_.1} parent=11 // pred_check_branch
          %259 = sbr.rel (%p257) target = $region32
        $region31: #{_lambda_.1} parent=11 // pred_region
          %261 = vsyncadd [#allocation9], 0
          %s262 = sshll.u32 %s5, 4
          %s263 = int_to_ptr.hbm [resolvable:$true] %s262
          %s264 = sshll.u32 [#allocation10], 4
          %s265 = int_to_ptr.vmem [resolvable:$true] %s264
          %270 = dma.hbm_to_vmem [thread:$0]  %s263, 1024, %s265, [#allocation9], 64, 64, 4
        $region32: #{_lambda_.1} parent=11 // pred_fallthru
          _
        // Predicated region
        $region33: #{_lambda_.1} parent=11 // pred_check
          %p271 = pneg %p173
        $region34: #{_lambda_.1} parent=11 // pred_check_branch
          %273 = sbr.rel (%p271) target = $region36
        $region35: #{_lambda_.1} parent=11 // pred_region
          _
        $region36: #{_lambda_.1} parent=11 // pred_fallthru
          _
      $region12: #{_lambda_.1} parent=5 // pred_fallthru
        _
      %p274 = scmp.lt.s32.totalorder %s21, 2
      // Predicated region
      $region37: #{_lambda_.1} parent=5 // pred_check
        %p275 = pneg %p274
      $region38: #{_lambda_.1} parent=5 // pred_check_branch
        %277 = sbr.rel (%p275) target = $region40
      $region39: #{_lambda_.1} parent=5 // pred_region
        // Predicated region
        $region41: #{_lambda_.1} parent=39 // pred_check
          %p278 = pneg %p41
        $region42: #{_lambda_.1} parent=39 // pred_check_branch
          %280 = sbr.rel (%p278) target = $region44
        $region43: #{_lambda_.1} parent=39 // pred_region
          %s281 = sand.u32 %s31, 1
          %s282 = scalar_lea.sflag [#allocation3], %s281
          %s283 = sand.u32 %s31, 1
          %s284 = smul.addr %s283, 4
          %s285 = scalar_lea.vmem [#allocation2], %s284
          %287 = vsyncadd %s282, 0
          %s288 = smul.addr %s21, 4
          %s289 = scalar_lea.hbm %s0, %s288
          %s291 = sshll.u32 %s289, 4
          %s292 = int_to_ptr.hbm [resolvable:$true] %s291
          %s293 = sshll.u32 %s285, 4
          %s294 = int_to_ptr.vmem [resolvable:$true] %s293
          %296 = dma.hbm_to_vmem [thread:$0]  %s292, 64, %s294, %s282
        $region44: #{_lambda_.1} parent=39 // pred_fallthru
          _
      $region40: #{_lambda_.1} parent=5 // pred_fallthru
        _
      %p297 = scmp.le.s32.totalorder 1, %s21
      %p298 = scmp.lt.s32.totalorder %s21, 3
      %p299 = pnand %p297, %p298
      %p300 = pneg %p299
      // Predicated region
      $region45: #{_lambda_.1} parent=5 // pred_check
        _
      $region46: #{_lambda_.1} parent=5 // pred_check_branch
        %302 = sbr.rel (%p299) target = $region48
      $region47: #{_lambda_.1} parent=5 // pred_region
        %s303 = ssub.s32 %s21, 1
        %s304 = sand.u32 %s34, 1
        %s305 = scalar_lea.sflag [#allocation3], %s304
        %s306 = sand.u32 %s34, 1
        %s307 = smul.addr %s306, 4
        %s308 = scalar_lea.vmem [#allocation2], %s307
        // Predicated region
        $region49: #{_lambda_.1} parent=47 // pred_check
          %p309 = pneg %p47
        $region50: #{_lambda_.1} parent=47 // pred_check_branch
          %311 = sbr.rel (%p309) target = $region52
        $region51: #{_lambda_.1} parent=47 // pred_region
          %313 = dma.done %s305, 64
        $region52: #{_lambda_.1} parent=47 // pred_fallthru
          _
        // Predicated region
        $region53: #{_lambda_.1} parent=47 // pred_check
          %p314 = pneg %p68
        $region54: #{_lambda_.1} parent=47 // pred_check_branch
          %316 = sbr.rel (%p314) target = $region56
        $region55: #{_lambda_.1} parent=47 // pred_region
          %318 = dma.done [#allocation6], 256
        $region56: #{_lambda_.1} parent=47 // pred_fallthru
          _
        // Predicated region
        $region57: #{_lambda_.1} parent=47 // pred_check
          %p319 = pneg %p89
        $region58: #{_lambda_.1} parent=47 // pred_check_branch
          %321 = sbr.rel (%p319) target = $region60
        $region59: #{_lambda_.1} parent=47 // pred_region
          %323 = dma.done [#allocation6], 16
        $region60: #{_lambda_.1} parent=47 // pred_fallthru
          _
        // Predicated region
        $region61: #{_lambda_.1} parent=47 // pred_check
          %p324 = pneg %p110
        $region62: #{_lambda_.1} parent=47 // pred_check_branch
          %326 = sbr.rel (%p324) target = $region64
        $region63: #{_lambda_.1} parent=47 // pred_region
          %328 = dma.done [#allocation9], 1024
        $region64: #{_lambda_.1} parent=47 // pred_fallthru
          _
        // Predicated region
        $region65: #{_lambda_.1} parent=47 // pred_check
          %p329 = pneg %p152
        $region66: #{_lambda_.1} parent=47 // pred_check_branch
          %331 = sbr.rel (%p329) target = $region68
        $region67: #{_lambda_.1} parent=47 // pred_region
          %333 = dma.done [#allocation9], 1024
        $region68: #{_lambda_.1} parent=47 // pred_fallthru
          _
        %s334 = sand.u32 %s34, 1
        %s335 = scalar_lea.sflag [#allocation3], %s334
        %s336 = sand.u32 %s34, 1
        %s337 = smul.addr %s336, 4
        %s338 = scalar_lea.vmem [#allocation2], %s337
        %p339 = pneg %p47
        %p340 = pneg %p44
        %p341 = pneg %p68
        %p342 = pneg %p65
        %p343 = pneg %p89
        %p344 = pneg %p86
        %p345 = pneg %p110
        %p346 = pneg %p107
        %p347 = pneg %p131
        %p348 = pneg %p128
        %p349 = pneg %p152
        %p350 = pneg %p149
        %p351 = pneg %p173
        %p352 = pneg %p170
        %p353 = pneg %p199
        %p354 = pneg %p196
        %s355 = sand.u32 %s186, 1
        %s356 = scalar_lea.sflag [#allocation4], %s355
        %s357 = sand.u32 %s186, 1
        %s358 = smul.addr %s357, 4
        %s359 = scalar_lea.vmem [#allocation11], %s358
        %v361 = vld [vmem:[%s308] sm:$0xf]
        %v362 = vld [vmem:[#allocation5] sm:$0xf]
        %v363 = vld [vmem:[#allocation5 + $0x4] sm:$0xf]
        %v364 = vld [vmem:[#allocation5 + $0x8] sm:$0xf]
        %v365 = vld [vmem:[#allocation5 + $0xc] sm:$0xf]
        %v366 = vld [vmem:[#allocation7] sm:$0x1]
        %v368 = vperm.slane %v366, 0
        %v374 = vunpack.c.l.b16 %v362
        %v375 = vunpack.c.l.b16 %v363
        %v376 = vunpack.c.l.b16 %v364
        %v377 = vunpack.c.l.b16 %v365
        %v378 = vpack.c.b16 %v375, %v374
        %v379 = vpack.c.b16 %v377, %v376
        %vm382 = vcmask 261120
        %v384 = vsel %vm382, %v361, 0
        %386 = vmatpush.bf16.msra.mxu0 0
        %387 = vmatpush.bf16.msra.mxu0 0
        %388 = vmatpush.bf16.msra.mxu0 0
        %389 = vmatpush.bf16.msra.mxu0 0
        %390 = vmatpush.bf16.msra.mxu0 0
        %391 = vmatpush.bf16.msra.mxu0 0
        %392 = vmatpush.bf16.msra.mxu0 %v379
        %393 = vmatpush.bf16.msra.mxu0 %v378
        %394 = vmatmul.bf16.gmra.mxu0 %v384
        %v395 = vpop.f32.mrf.mxu0
        %v396 = vadd.f32 %v368, %v395
        %v397 = vpop.f32.mrf.mxu0
        %398 = vdwg.mxu0
        %v399 = vmax.f32 %v396, 0.0
        %v400 = vpack.c.bf16 %v399, %v399
        %v401 = vld [vmem:[#allocation8] sm:$0xf]
        %v402 = vld [vmem:[#allocation8 + $0x4] sm:$0xf]
        %v403 = vld [vmem:[#allocation8 + $0x8] sm:$0xf]
        %v404 = vld [vmem:[#allocation8 + $0xc] sm:$0xf]
        %v405 = vld [vmem:[#allocation8 + $0x10] sm:$0xf]
        %v406 = vld [vmem:[#allocation8 + $0x14] sm:$0xf]
        %v407 = vld [vmem:[#allocation8 + $0x18] sm:$0xf]
        %v408 = vld [vmem:[#allocation8 + $0x1c] sm:$0xf]
        %v409 = vld [vmem:[#allocation8 + $0x20] sm:$0xf]
        %v410 = vld [vmem:[#allocation8 + $0x24] sm:$0xf]
        %v411 = vld [vmem:[#allocation8 + $0x28] sm:$0xf]
        %v412 = vld [vmem:[#allocation8 + $0x2c] sm:$0xf]
        %v413 = vld [vmem:[#allocation8 + $0x30] sm:$0xf]
        %v414 = vld [vmem:[#allocation8 + $0x34] sm:$0xf]
        %v415 = vld [vmem:[#allocation8 + $0x38] sm:$0xf]
        %v416 = vld [vmem:[#allocation8 + $0x3c] sm:$0xf]
        %v417 = vld [vmem:[%s4] sm:$0x1]
        %v419 = vperm.slane %v417, 0
        %v437 = vunpack.c.l.b16 %v401
        %v438 = vunpack.c.l.b16 %v402
        %v439 = vunpack.c.l.b16 %v403
        %v440 = vunpack.c.l.b16 %v404
        %v441 = vunpack.c.l.b16 %v405
        %v442 = vunpack.c.l.b16 %v406
        %v443 = vunpack.c.l.b16 %v407
        %v444 = vunpack.c.l.b16 %v408
        %v445 = vunpack.c.l.b16 %v409
        %v446 = vunpack.c.l.b16 %v410
        %v447 = vunpack.c.l.b16 %v411
        %v448 = vunpack.c.l.b16 %v412
        %v449 = vunpack.c.l.b16 %v413
        %v450 = vunpack.c.l.b16 %v414
        %v451 = vunpack.c.l.b16 %v415
        %v452 = vunpack.c.l.b16 %v416
        %v453 = vpack.c.b16 %v438, %v437
        %v454 = vpack.c.b16 %v440, %v439
        %v455 = vpack.c.b16 %v442, %v441
        %v456 = vpack.c.b16 %v444, %v443
        %v457 = vpack.c.b16 %v446, %v445
        %v458 = vpack.c.b16 %v448, %v447
        %v459 = vpack.c.b16 %v450, %v449
        %v460 = vpack.c.b16 %v452, %v451
        %469 = vmatpush.bf16.msra.mxu0 %v460
        %470 = vmatpush.bf16.msra.mxu0 %v459
        %471 = vmatpush.bf16.msra.mxu0 %v458
        %472 = vmatpush.bf16.msra.mxu0 %v457
        %473 = vmatpush.bf16.msra.mxu0 %v456
        %474 = vmatpush.bf16.msra.mxu0 %v455
        %475 = vmatpush.bf16.msra.mxu0 %v454
        %476 = vmatpush.bf16.msra.mxu0 %v453
        %477 = vmatmul.bf16.gmra.mxu0 %v400
        %v478 = vpop.f32.mrf.mxu0
        %v479 = vadd.f32 %v419, %v478
        %v480 = vpop.f32.mrf.mxu0
        %481 = vdwg.mxu0
        %v482 = vmax.f32 %v479, 0.0
        %v483 = vpack.c.bf16 %v482, %v482
        %v484 = vld [vmem:[#allocation10] sm:$0xf]
        %v485 = vld [vmem:[#allocation10 + $0x4] sm:$0xf]
        %v486 = vld [vmem:[#allocation10 + $0x8] sm:$0xf]
        %v487 = vld [vmem:[#allocation10 + $0xc] sm:$0xf]
        %v488 = vld [vmem:[#allocation10 + $0x10] sm:$0xf]
        %v489 = vld [vmem:[#allocation10 + $0x14] sm:$0xf]
        %v490 = vld [vmem:[#allocation10 + $0x18] sm:$0xf]
        %v491 = vld [vmem:[#allocation10 + $0x1c] sm:$0xf]
        %v492 = vld [vmem:[#allocation10 + $0x20] sm:$0xf]
        %v493 = vld [vmem:[#allocation10 + $0x24] sm:$0xf]
        %v494 = vld [vmem:[#allocation10 + $0x28] sm:$0xf]
        %v495 = vld [vmem:[#allocation10 + $0x2c] sm:$0xf]
        %v496 = vld [vmem:[#allocation10 + $0x30] sm:$0xf]
        %v497 = vld [vmem:[#allocation10 + $0x34] sm:$0xf]
        %v498 = vld [vmem:[#allocation10 + $0x38] sm:$0xf]
        %v499 = vld [vmem:[#allocation10 + $0x3c] sm:$0xf]
        %v500 = vld [vmem:[%s6] sm:$0x1]
        %v502 = vperm.slane %v500, 0
        %v520 = vunpack.c.l.b16 %v484
        %v521 = vunpack.c.l.b16 %v485
        %v522 = vunpack.c.l.b16 %v486
        %v523 = vunpack.c.l.b16 %v487
        %v524 = vunpack.c.l.b16 %v488
        %v525 = vunpack.c.l.b16 %v489
        %v526 = vunpack.c.l.b16 %v490
        %v527 = vunpack.c.l.b16 %v491
        %v528 = vunpack.c.l.b16 %v492
        %v529 = vunpack.c.l.b16 %v493
        %v530 = vunpack.c.l.b16 %v494
        %v531 = vunpack.c.l.b16 %v495
        %v532 = vunpack.c.l.b16 %v496
        %v533 = vunpack.c.l.b16 %v497
        %v534 = vunpack.c.l.b16 %v498
        %v535 = vunpack.c.l.b16 %v499
        %v536 = vpack.c.b16 %v521, %v520
        %v537 = vpack.c.b16 %v523, %v522
        %v538 = vpack.c.b16 %v525, %v524
        %v539 = vpack.c.b16 %v527, %v526
        %v540 = vpack.c.b16 %v529, %v528
        %v541 = vpack.c.b16 %v531, %v530
        %v542 = vpack.c.b16 %v533, %v532
        %v543 = vpack.c.b16 %v535, %v534
        %552 = vmatpush.bf16.msra.mxu0 %v543
        %553 = vmatpush.bf16.msra.mxu0 %v542
        %554 = vmatpush.bf16.msra.mxu0 %v541
        %555 = vmatpush.bf16.msra.mxu0 %v540
        %556 = vmatpush.bf16.msra.mxu0 %v539
        %557 = vmatpush.bf16.msra.mxu0 %v538
        %558 = vmatpush.bf16.msra.mxu0 %v537
        %559 = vmatpush.bf16.msra.mxu0 %v536
        %560 = vmatmul.bf16.gmra.mxu0 %v483
        %v561 = vpop.f32.mrf.mxu0
        %v562 = vadd.f32 %v502, %v561
        %v563 = vpop.f32.mrf.mxu0
        %564 = vdwg.mxu0
        %v565 = vpack.c.bf16 %v562, %v562
        %566 = vst [vmem:[%s359] sm:$0xf] %v565
        %s567 = sand.u32 %s186, 1
        %s568 = scalar_lea.sflag [#allocation4], %s567
        %s569 = sand.u32 %s186, 1
        %s570 = smul.addr %s569, 4
        %s571 = scalar_lea.vmem [#allocation11], %s570
        // Predicated region
        $region69: #{_lambda_.1} parent=47 // pred_check
          %p572 = pneg %p196
        $region70: #{_lambda_.1} parent=47 // pred_check_branch
          %574 = sbr.rel (%p572) target = $region72
        $region71: #{_lambda_.1} parent=47 // pred_region
          %576 = vsyncadd %s568, 0
          %s577 = smul.addr %s26, 4
          %s578 = scalar_lea.hbm %s7, %s577
          %s580 = sshll.u32 %s571, 4
          %s581 = int_to_ptr.vmem [resolvable:$true] %s580
          %s582 = sshll.u32 %s578, 4
          %s583 = int_to_ptr.hbm [resolvable:$true] %s582
          %585 = dma.vmem_to_hbm [thread:$0]  %s581, 64, %s583, %s568
        $region72: #{_lambda_.1} parent=47 // pred_fallthru
          _
      $region48: #{_lambda_.1} parent=5 // pred_fallthru
        _
      %p586 = scmp.le.s32.totalorder 2, %s21
      // Predicated region
      $region73: #{_lambda_.1} parent=5 // pred_check
        %p587 = pneg %p586
      $region74: #{_lambda_.1} parent=5 // pred_check_branch
        %589 = sbr.rel (%p587) target = $region76
      $region75: #{_lambda_.1} parent=5 // pred_region
        %s590 = ssub.s32 %s21, 2
        // Predicated region
        $region77: #{_lambda_.1} parent=75 // pred_check
          %p591 = pneg %p202
        $region78: #{_lambda_.1} parent=75 // pred_check_branch
          %593 = sbr.rel (%p591) target = $region80
        $region79: #{_lambda_.1} parent=75 // pred_region
          %s594 = sand.u32 %s187, 1
          %s595 = scalar_lea.sflag [#allocation4], %s594
          %s596 = sand.u32 %s187, 1
          %s597 = smul.addr %s596, 4
          %s598 = scalar_lea.vmem [#allocation11], %s597
          %600 = dma.done %s595, 64
        $region80: #{_lambda_.1} parent=75 // pred_fallthru
          _
      $region76: #{_lambda_.1} parent=5 // pred_fallthru
        _
    $region6: #{_lambda_.1} parent=1 // loop_footer
      %s25 = sadd.s32 1, %s21
    $region7: #{_lambda_.1} parent=1 // loop_footer_branch
      %20 = sbr.rel target = $region3
    $region8: #{_lambda_.1} parent=1 // loop_exit
      _
    %601 = vsyncpa [#allocation3], 1
    %s602 = scalar_lea.sflag [#allocation3], 1
    %603 = vsyncpa %s602, 1
    %604 = vsyncpa [#allocation6], 1
    %605 = vsyncpa [#allocation9], 1
    %606 = vsyncpa [#allocation4], 1
    %s607 = scalar_lea.sflag [#allocation4], 1
    %608 = vsyncpa %s607, 1

</llo_original>
